<compile_context>
chip_gen: v6e
topology: v6e:2x2x1
jax: 0.10.0
libtpu: 0.0.40
codegen_flags: <defaults>
</compile_context>

<pallas_src>
import functools

import jax
import jax.numpy as jnp
from jax.experimental import pallas as pl
from jax.experimental.pallas import tpu as pltpu

EPSILON_PARAMETER = 1e-6   # module default epsilon_parameter
# module defaults: rectify=True, alpha_parameter=1, inverse=False


def _gdn_kernel(x_ref, gamma_ref, beta_ref, o_ref):
    # x_ref: (C, T) channel-major slab (one batch element, one spatial tile)
    # gamma_ref: (C, C); beta_ref: (C, 1) broadcasting over lanes.
    # rectify=True and alpha_parameter==1 -> norm_pool = relu(x)
    x = jnp.maximum(x_ref[...], jnp.zeros((), x_ref.dtype))
    # 1x1 conv across channels == gamma @ x (per-pixel channel mix on the MXU).
    # Keep x in its native dtype (bf16-friendly); accumulate in f32.
    norm = jnp.dot(gamma_ref[...], x, preferred_element_type=jnp.float32)
    norm = norm + beta_ref[...]
    # epsilon_parameter = 1e-6 (neither 1 nor 0.5) -> pow; inverse=False -> div.
    # x / norm**eps == x * exp(-eps * log(norm))  (log/exp live on the EUP slot;
    # edge cases norm<=0 produce the same NaN/inf as pow + divide would).
    scale = jnp.exp(jnp.float32(-EPSILON_PARAMETER) * jnp.log(norm))
    o_ref[...] = (x.astype(jnp.float32) * scale).astype(o_ref.dtype)


@functools.partial(jax.jit, static_argnames=("tile_hw",))
def gdn_forward(x_nchw, gamma, beta, tile_hw=2048):
    """GDN forward. x_nchw: [N, C, H, W]; gamma: [C, C]; beta: [C]."""
    n, c, h, w = x_nchw.shape
    hw = h * w
    # Free reshape — native layout kept, no transpose / no extra HBM pass.
    x = x_nchw.reshape(n, c, hw)

    # Large lane-dense spatial tile (multiple of 128, or the full extent).
    tile = min(tile_hw, hw)
    hw_pad = pl.cdiv(hw, tile) * tile
    if hw_pad != hw:
        # Rare: only when hw > tile and not tile-aligned.  Padded columns see
        # relu(0)=0 and are sliced off afterwards (no cross-column mixing).
        x = jnp.pad(x, ((0, 0), (0, 0), (0, hw_pad - hw)))

    gamma_f32 = gamma.astype(jnp.float32)          # resident (constant index_map)
    beta_col = beta.astype(jnp.float32).reshape(c, 1)
    # TODO(synk): for C not (8,128)-aligned we rely on masked sublane access
    # rather than padding x's channel dim (padding x would cost an HBM pass).

    itemsize = x.dtype.itemsize
    block_bytes = c * tile * itemsize
    cost = pl.CostEstimate(
        flops=2 * n * hw * c * c,
        transcendentals=2 * n * hw * c,            # log + exp per element
        bytes_accessed=2 * n * c * hw * itemsize + c * c * 4 + c * 4,
    )
    # Double-buffered in+out blocks + resident gamma/beta; clamp to a limit
    # that is safe on v7x (64 MiB physical) and useful on v5e (16 MiB default).
    vmem_limit = int(min(max(8 * block_bytes + c * c * 4 + (1 << 20),
                             16 << 20), 32 << 20))

    grid = (n, hw_pad // tile)
    out = pl.pallas_call(
        _gdn_kernel,
        out_shape=jax.ShapeDtypeStruct((n, c, hw_pad), x_nchw.dtype),
        grid_spec=pltpu.PrefetchScalarGridSpec(
            num_scalar_prefetch=0,
            grid=grid,
            in_specs=[
                pl.BlockSpec((None, c, tile), lambda ni, ji: (ni, 0, ji)),
                pl.BlockSpec((c, c), lambda ni, ji: (0, 0)),
                pl.BlockSpec((c, 1), lambda ni, ji: (0, 0)),
            ],
            out_specs=pl.BlockSpec((None, c, tile), lambda ni, ji: (ni, 0, ji)),
        ),
        compiler_params=pltpu.CompilerParams(
            dimension_semantics=("parallel", "parallel"),
            vmem_limit_bytes=vmem_limit),
        cost_estimate=cost,
    )(x, gamma_f32, beta_col)

    if hw_pad != hw:
        out = out[:, :, :hw]
    return out.reshape(n, c, h, w)


def gdn_reference(x_nchw, gamma, beta):
    """Pure-JAX reference matching the PyTorch forward (module defaults)."""
    x = jnp.maximum(x_nchw, 0.0)
    norm = jnp.einsum("oc,nchw->nohw", gamma, x) + beta.reshape(1, -1, 1, 1)
    norm = jnp.power(norm, EPSILON_PARAMETER)
    return x / norm


if __name__ == "__main__":
    key = jax.random.PRNGKey(0)
    N, C, H, W = 2, 4, 16, 16

    x = jax.random.normal(key, (N, C, H, W), dtype=jnp.float32)

    # Deterministic parameter init matching GDN.__init__ defaults:
    # beta = ones(C), gamma = 0.1 * eye(C)
    beta = jnp.ones((C,), dtype=jnp.float32)
    gamma = 0.1 * jnp.eye(C, dtype=jnp.float32)

    out = gdn_forward(x, gamma, beta)
    out = jax.block_until_ready(out)

    ref = gdn_reference(x, gamma, beta)
    assert out.shape == (N, C, H, W)
    assert jnp.allclose(out, ref, atol=1e-5, rtol=1e-5), "mismatch vs reference"

    print("KERNEL_OK")
</pallas_src>

<mosaic_0001>
module attributes {stable_mosaic.version = 11 : i64} {
  func.func @_gdn_kernel(%arg0: i32, %arg1: i32, %arg2: memref<1x4x256xf32, #tpu.memory_space<vmem>>, %arg3: memref<4x4xf32, #tpu.memory_space<vmem>>, %arg4: memref<4x1xf32, #tpu.memory_space<vmem>>, %arg5: memref<1x4x256xf32, #tpu.memory_space<vmem>>) attributes {dimension_semantics = [#tpu.dimension_semantics<parallel>, #tpu.dimension_semantics<parallel>], iteration_bounds = array<i64: 2, 1>, scalar_prefetch = 0 : i64, scratch_operands = 0 : i64, tpu.core_type = #tpu.core_type<tc>, window_params = [{transform_indices = @transform_0, window_bounds = array<i64: 1, 4, 256>}, {pipeline_mode = #tpu.pipeline_mode<synchronous>, transform_indices = @transform_1, window_bounds = array<i64: 4, 4>}, {pipeline_mode = #tpu.pipeline_mode<synchronous>, transform_indices = @transform_2, window_bounds = array<i64: 4, 1>}, {transform_indices = @transform_3, window_bounds = array<i64: 1, 4, 256>}]} {
    %c0 = arith.constant 0 : index
    %c0_0 = arith.constant 0 : index
    %c0_1 = arith.constant 0 : index
    %0 = vector.load %arg2[%c0, %c0_0, %c0_1] : memref<1x4x256xf32, #tpu.memory_space<vmem>>, vector<1x4x256xf32>
    %1 = vector.shape_cast %0 : vector<1x4x256xf32> to vector<4x256xf32>
    %cst = arith.constant 0.000000e+00 : f32
    %2 = vector.broadcast %cst : f32 to vector<4x256xf32>
    %3 = arith.maximumf %1, %2 : vector<4x256xf32>
    %c0_2 = arith.constant 0 : index
    %c0_3 = arith.constant 0 : index
    %4 = vector.load %arg3[%c0_2, %c0_3] : memref<4x4xf32, #tpu.memory_space<vmem>>, vector<4x4xf32>
    %cst_4 = arith.constant dense<0.000000e+00> : vector<4x256xf32>
    %5 = tpu.matmul %4, %3, %cst_4 {dimension_numbers = #tpu.dot_dimension_numbers<[1], [0], [0], [1], [0, 0, 1, 1], [], []>} : vector<4x4xf32>, vector<4x256xf32>, vector<4x256xf32> -> vector<4x256xf32>
    %c0_5 = arith.constant 0 : index
    %c0_6 = arith.constant 0 : index
    %6 = vector.load %arg4[%c0_5, %c0_6] : memref<4x1xf32, #tpu.memory_space<vmem>>, vector<4x1xf32>
    %7 = vector.broadcast %6 : vector<4x1xf32> to vector<4x256xf32>
    %8 = arith.addf %5, %7 : vector<4x256xf32>
    %9 = math.log %8 : vector<4x256xf32>
    %cst_7 = arith.constant -9.99999997E-7 : f32
    %10 = vector.broadcast %cst_7 : f32 to vector<4x256xf32>
    %11 = arith.mulf %10, %9 : vector<4x256xf32>
    %12 = math.exp %11 : vector<4x256xf32>
    %13 = arith.mulf %3, %12 : vector<4x256xf32>
    %c0_8 = arith.constant 0 : index
    %c0_9 = arith.constant 0 : index
    %c0_10 = arith.constant 0 : index
    %14 = vector.load %arg5[%c0_8, %c0_9, %c0_10] : memref<1x4x256xf32, #tpu.memory_space<vmem>>, vector<1x4x256xf32>
    %15 = vector.shape_cast %14 : vector<1x4x256xf32> to vector<4x256xf32>
    %16 = vector.shape_cast %13 : vector<4x256xf32> to vector<1x4x256xf32>
    tpu.vector_store %arg5[%c0_8, %c0_9, %c0_10], %16 {strides = array<i32>} : memref<1x4x256xf32, #tpu.memory_space<vmem>>, vector<1x4x256xf32>,
    return
  }
  func.func @transform_0(%arg0: i32, %arg1: i32) -> (i32, i32, i32) {
    %c0_i32 = arith.constant 0 : i32
    %c0_i32_0 = arith.constant 0 : i32
    return %arg0, %c0_i32, %arg1 : i32, i32, i32
  }
  func.func @transform_1(%arg0: i32, %arg1: i32) -> (i32, i32) {
    %c0_i32 = arith.constant 0 : i32
    %c0_i32_0 = arith.constant 0 : i32
    %c0_i32_1 = arith.constant 0 : i32
    return %c0_i32, %c0_i32_0 : i32, i32
  }
  func.func @transform_2(%arg0: i32, %arg1: i32) -> (i32, i32) {
    %c0_i32 = arith.constant 0 : i32
    %c0_i32_0 = arith.constant 0 : i32
    %c0_i32_1 = arith.constant 0 : i32
    return %c0_i32, %c0_i32_0 : i32, i32
  }
  func.func @transform_3(%arg0: i32, %arg1: i32) -> (i32, i32, i32) {
    %c0_i32 = arith.constant 0 : i32
    %c0_i32_0 = arith.constant 0 : i32
    return %arg0, %c0_i32, %arg1 : i32, i32, i32
  }
}

</mosaic_0001>

<llo_original>
// kernel: gdn_forward.1
$region0: #{gdn_forward.1}
  #allocation0 [shape = 'u32[]', space=smem, size = 0x4, offset = 0x4, fixed_abs, tag = 'smem constant byte address 0x4 - core index']
  #allocation1 [shape = 'u32[144,128]{1,0:T(1,128)}', space=vmem, size = 0x12000, scoped, tag = 'internal scratch']
  %s0 = inlined_call_operand.vmem [shape: f32[2,4,256], index: 0, kind: input, shape index: {}]
  %s1 = inlined_call_operand.vmem [shape: f32[4,4], index: 1, kind: input, shape index: {}]
  %s2 = inlined_call_operand.vmem [shape: f32[4,1], index: 2, kind: input, shape index: {}]
  %s3 = inlined_call_operand.vmem [shape: f32[2,4,256], index: 3, kind: output, shape index: {}]
  %s4 = sld [smem:[#allocation0]]
  $region45: #{gdn_forward.1} parent=0
    _
  %s6 = ssub.s32 1, %s4
  %s7 = scalar_select 0, %s6, %s4
  loop: start=0, step=1, limit=4
  $region2: #{gdn_forward.1} parent=0 // loop_pre_header
    _
  $region3: #{gdn_forward.1} parent=0 // loop_header
    %s9 = sphi 0, %s13
    %p10 = scmp.ge.s32.totalorder %s9, 4
    %s16 = sphi 0, %s28
    %s17 = sphi 0, %s24
    %s18 = sphi 0, %s16
    %s19 = sphi 0, %s17
    %s20 = sphi 0, %s18
    %s21 = sphi 0, %s19
    %s33 = sphi 0, %s35
    %s36 = sphi 0, %s33
    %s37 = sphi 0, %s36
    %s53 = sphi 0, %s37
    %s57 = sphi 0, %s57
    %s59 = sphi 0, %s57
    %s60 = sphi 0, %s59
    %s74 = sphi 0, %s60
    %s78 = sphi 0, %s78
    %s80 = sphi 0, %s78
    %s81 = sphi 0, %s80
    %s95 = sphi 0, %s81
    %s103 = sphi 0, %s105
    %s106 = sphi 0, %s103
    %s107 = sphi 0, %s106
    %s123 = sphi 0, %s107
  $region4: #{gdn_forward.1} parent=0 // loop_header_branch
    %12 = sbr.rel (%p10) target = $region8
  $region5: #{gdn_forward.1} parent=0 // loop_body
    %s14 = ssub.s32 %s9, 1
    %s15 = ssub.s32 %s9, 2
    %s22 = sadd.s32 1, %s17
    %p23 = scmp.ge.s32.totalorder %s22, 1
    %s24 = scalar_select %p23, 0, %s22
    %s25 = sadd.s32 1, %s16
    %s26 = scalar_select %p23, %s25, %s16
    %p27 = scmp.ge.s32.totalorder %s26, 2
    %s28 = scalar_select %p27, 0, %s26
    %s29 = ssub.s32 %s16, %s28
    %s30 = ssub.s32 %s17, %s24
    %s31 = sor.u32 %s29, %s30
    %p32 = scmp.eq.s32.totalorder %s31, 0
    %s34 = sadd.s32 %s33, 1
    %s35 = scalar_select %p32, %s33, %s34
    %p38 = pneg %p32
    %p39 = scmp.eq.s32.totalorder %s9, 1
    %p40 = por %p38, %p39
    %p41 = scmp.ne.s32.totalorder %s33, %s36
    %p42 = scmp.eq.s32.totalorder %s9, 0
    %p43 = por %p41, %p42
    %p44 = scmp.ne.s32.totalorder %s33, %s36
    %p45 = scmp.eq.s32.totalorder %s14, 1
    %p46 = por %p44, %p45
    %p47 = scmp.ne.s32.totalorder %s36, %s37
    %p48 = scmp.eq.s32.totalorder %s14, 0
    %p49 = por %p47, %p48
    %p50 = scmp.ne.s32.totalorder %s36, %s37
    %p51 = scmp.eq.s32.totalorder %s15, 1
    %p52 = por %p50, %p51
    %p54 = scmp.ne.s32.totalorder %s37, %s53
    %p55 = scmp.eq.s32.totalorder %s15, 0
    %p56 = por %p54, %p55
    %s58 = sadd.s32 %s57, 1
    %p61 = scmp.eq.s32.totalorder %s9, 1
    %p62 = scmp.ne.s32.totalorder %s57, %s59
    %p63 = scmp.eq.s32.totalorder %s9, 0
    %p64 = por %p62, %p63
    %p65 = scmp.ne.s32.totalorder %s57, %s59
    %p66 = scmp.eq.s32.totalorder %s14, 1
    %p67 = por %p65, %p66
    %p68 = scmp.ne.s32.totalorder %s59, %s60
    %p69 = scmp.eq.s32.totalorder %s14, 0
    %p70 = por %p68, %p69
    %p71 = scmp.ne.s32.totalorder %s59, %s60
    %p72 = scmp.eq.s32.totalorder %s15, 1
    %p73 = por %p71, %p72
    %p75 = scmp.ne.s32.totalorder %s60, %s74
    %p76 = scmp.eq.s32.totalorder %s15, 0
    %p77 = por %p75, %p76
    %s79 = sadd.s32 %s78, 1
    %p82 = scmp.eq.s32.totalorder %s9, 1
    %p83 = scmp.ne.s32.totalorder %s78, %s80
    %p84 = scmp.eq.s32.totalorder %s9, 0
    %p85 = por %p83, %p84
    %p86 = scmp.ne.s32.totalorder %s78, %s80
    %p87 = scmp.eq.s32.totalorder %s14, 1
    %p88 = por %p86, %p87
    %p89 = scmp.ne.s32.totalorder %s80, %s81
    %p90 = scmp.eq.s32.totalorder %s14, 0
    %p91 = por %p89, %p90
    %p92 = scmp.ne.s32.totalorder %s80, %s81
    %p93 = scmp.eq.s32.totalorder %s15, 1
    %p94 = por %p92, %p93
    %p96 = scmp.ne.s32.totalorder %s81, %s95
    %p97 = scmp.eq.s32.totalorder %s15, 0
    %p98 = por %p96, %p97
    %s99 = ssub.s32 %s16, %s28
    %s100 = ssub.s32 %s17, %s24
    %s101 = sor.u32 %s99, %s100
    %p102 = scmp.eq.s32.totalorder %s101, 0
    %s104 = sadd.s32 %s103, 1
    %s105 = scalar_select %p102, %s103, %s104
    %p108 = pneg %p102
    %p109 = scmp.eq.s32.totalorder %s9, 1
    %p110 = por %p108, %p109
    %p111 = scmp.ne.s32.totalorder %s103, %s106
    %p112 = scmp.eq.s32.totalorder %s9, 0
    %p113 = por %p111, %p112
    %p114 = scmp.ne.s32.totalorder %s103, %s106
    %p115 = scmp.eq.s32.totalorder %s14, 1
    %p116 = por %p114, %p115
    %p117 = scmp.ne.s32.totalorder %s106, %s107
    %p118 = scmp.eq.s32.totalorder %s14, 0
    %p119 = por %p117, %p118
    %p120 = scmp.ne.s32.totalorder %s106, %s107
    %p121 = scmp.eq.s32.totalorder %s15, 1
    %p122 = por %p120, %p121
    %p124 = scmp.ne.s32.totalorder %s107, %s123
    %p125 = scmp.eq.s32.totalorder %s15, 0
    %p126 = por %p124, %p125
    %p127 = scmp.le.s32.totalorder 1, %s9
    %p128 = scmp.lt.s32.totalorder %s9, 3
    %p129 = pnand %p127, %p128
    %p130 = pneg %p129
    // Predicated region
    $region9: #{gdn_forward.1} parent=5 // pred_check
      _
    $region10: #{gdn_forward.1} parent=5 // pred_check_branch
      %132 = sbr.rel (%p129) target = $region12
    $region11: #{gdn_forward.1} parent=5 // pred_region
      %s133 = ssub.s32 %s9, 1
      // Predicated region
      $region13: #{gdn_forward.1} parent=11 // pred_check
        %p134 = pneg %p70
      $region14: #{gdn_forward.1} parent=11 // pred_check_branch
        %136 = sbr.rel (%p134) target = $region16
      $region15: #{gdn_forward.1} parent=11 // pred_region
        _
      $region16: #{gdn_forward.1} parent=11 // pred_fallthru
        _
      // Predicated region
      $region17: #{gdn_forward.1} parent=11 // pred_check
        %p137 = pneg %p91
      $region18: #{gdn_forward.1} parent=11 // pred_check_branch
        %139 = sbr.rel (%p137) target = $region20
      $region19: #{gdn_forward.1} parent=11 // pred_region
        _
      $region20: #{gdn_forward.1} parent=11 // pred_fallthru
        _
    $region12: #{gdn_forward.1} parent=5 // pred_fallthru
      _
    %p140 = scmp.lt.s32.totalorder %s9, 2
    // Predicated region
    $region21: #{gdn_forward.1} parent=5 // pred_check
      %p141 = pneg %p140
    $region22: #{gdn_forward.1} parent=5 // pred_check_branch
      %143 = sbr.rel (%p141) target = $region24
    $region23: #{gdn_forward.1} parent=5 // pred_region
      // Predicated region
      $region25: #{gdn_forward.1} parent=23 // pred_check
        %p144 = pneg %p43
      $region26: #{gdn_forward.1} parent=23 // pred_check_branch
        %146 = sbr.rel (%p144) target = $region28
      $region27: #{gdn_forward.1} parent=23 // pred_region
        %s147 = smul.u32 2, %s17
        %p148 = scmp.lt.s32.totalorder %s16, 1
        %s149 = scalar_select %p148, %s16, 1
        %p150 = scmp.lt.s32.totalorder %s147, 1
        %s151 = scalar_select %p150, %s147, 1
        %s152 = smul.addr %s149, 2
        %s153 = sadd.s32 %s151, %s152
        %s154 = smul.addr %s153, 4
        %s155 = scalar_lea.vmem %s0, %s154
        %s156 = smul.u32 2, %s17
      $region28: #{gdn_forward.1} parent=23 // pred_fallthru
        _
    $region24: #{gdn_forward.1} parent=5 // pred_fallthru
      _
    %p157 = scmp.le.s32.totalorder 1, %s9
    %p158 = scmp.lt.s32.totalorder %s9, 3
    %p159 = pnand %p157, %p158
    %p160 = pneg %p159
    // Predicated region
    $region29: #{gdn_forward.1} parent=5 // pred_check
      _
    $region30: #{gdn_forward.1} parent=5 // pred_check_branch
      %162 = sbr.rel (%p159) target = $region32
    $region31: #{gdn_forward.1} parent=5 // pred_region
      %s163 = ssub.s32 %s9, 1
      %s164 = smul.u32 2, %s19
      %p165 = scmp.lt.s32.totalorder %s18, 1
      %s166 = scalar_select %p165, %s18, 1
      %p167 = scmp.lt.s32.totalorder %s164, 1
      %s168 = scalar_select %p167, %s164, 1
      %s169 = smul.addr %s166, 2
      %s170 = sadd.s32 %s168, %s169
      %s171 = smul.addr %s170, 4
      %s172 = scalar_lea.vmem %s0, %s171
      %p173 = pneg %p49
      %p174 = pneg %p46
      %p175 = pneg %p70
      %p176 = pneg %p67
      %p177 = pneg %p91
      %p178 = pneg %p88
      %p179 = pneg %p119
      %p180 = pneg %p116
      %s181 = smul.u32 2, %s19
      %p182 = scmp.lt.s32.totalorder %s18, 1
      %s183 = scalar_select %p182, %s18, 1
      %p184 = scmp.lt.s32.totalorder %s181, 1
      %s185 = scalar_select %p184, %s181, 1
      %s186 = smul.addr %s183, 2
      %s187 = sadd.s32 %s185, %s186
      %s188 = smul.addr %s187, 4
      %s189 = scalar_lea.vmem %s3, %s188
      %s190 = smul.u32 2, %s19
      %p191 = scmp.lt.s32.totalorder %s18, 1
      %s192 = scalar_select %p191, %s18, 1
      %p193 = scmp.lt.s32.totalorder %s190, 1
      %s194 = scalar_select %p193, %s190, 1
      %s195 = smul.addr %s192, 2
      %s196 = sadd.s32 %s194, %s195
      %s197 = smul.addr %s196, 4
      %s198 = scalar_lea.vmem %s0, %s197
      %s199 = smul.u32 2, %s19
      %s200 = smul.u32 2, %s19
      %p201 = scmp.lt.s32.totalorder %s18, 1
      %s202 = scalar_select %p201, %s18, 1
      %p203 = scmp.lt.s32.totalorder %s200, 1
      %s204 = scalar_select %p203, %s200, 1
      %s205 = smul.addr %s202, 2
      %s206 = sadd.s32 %s204, %s205
      %s207 = smul.addr %s206, 4
      %s208 = scalar_lea.vmem %s3, %s207
      %s209 = smul.u32 2, %s19
      %v210 = vld [vmem:[%s198] sm:$0xff]
      %v211 = vmax.f32 %v210, 0.0
      %v212 = vld [vmem:[%s1] sm:$0xf]
      %v213 = vld [vmem:[%s2] sm:$0xf]
      %215 = vset.pattern.permute.xlu0 0
      %216 = vperm.xlu0 %215, %v213
      %v217 = vpop.permute.xlu0 %216
      %v220 = vcombine.high %v211, %v211
      %vm221 = vcmask 31744
      %v223 = vsel %vm221, %v212, 0
      %vm225 = vcmask 1043456
      %v226 = vsel %vm225, %v211, 0
      %v228 = vsel %vm225, %v220, 0
      %230 = vmatprep.subr.mxu0 0.0
      %231 = vmatpush1.msra.mxu0 0.0
      %232 = vmatprep.subr.mxu0 0.0
      %233 = vmatpush1.msra.mxu0 0.0
      %234 = vmatprep.subr.mxu0 0.0
      %235 = vmatpush1.msra.mxu0 0.0
      %236 = vmatprep.subr.mxu0 0.0
      %237 = vmatpush1.msra.mxu0 0.0
      %238 = vmatprep.subr.mxu0 0.0
      %239 = vmatpush1.msra.mxu0 0.0
      %240 = vmatprep.subr.mxu0 0.0
      %241 = vmatpush1.msra.mxu0 0.0
      %242 = vmatprep.subr.mxu0 0.0
      %243 = vmatpush1.msra.mxu0 0.0
      %244 = vmatprep.subr.mxu0 0.0
      %245 = vmatpush1.msra.mxu0 0.0
      %246 = vmatprep.subr.mxu0 0.0
      %247 = vmatpush1.msra.mxu0 0.0
      %248 = vmatprep.subr.mxu0 0.0
      %249 = vmatpush1.msra.mxu0 0.0
      %250 = vmatprep.subr.mxu0 0.0
      %251 = vmatpush1.msra.mxu0 0.0
      %252 = vmatprep.subr.mxu0 0.0
      %253 = vmatpush1.msra.mxu0 0.0
      %254 = vmatprep.subr.mxu0 0.0
      %255 = vmatpush1.msra.mxu0 0.0
      %256 = vmatprep.subr.mxu0 0.0
      %257 = vmatpush1.msra.mxu0 0.0
      %258 = vmatprep.subr.mxu0 0.0
      %259 = vmatpush1.msra.mxu0 0.0
      %260 = vmatprep.subr.mxu0 %v228
      %261 = vmatpush1.msra.mxu0 %v226
      %262 = vmatprep.subr.mxu0 0.0
      %263 = vmatpush2.msra.mxu0 0.0
      %264 = vmatprep.subr.mxu0 0.0
      %265 = vmatpush2.msra.mxu0 0.0
      %266 = vmatprep.subr.mxu0 0.0
      %267 = vmatpush2.msra.mxu0 0.0
      %268 = vmatprep.subr.mxu0 0.0
      %269 = vmatpush2.msra.mxu0 0.0
      %270 = vmatprep.subr.mxu0 0.0
      %271 = vmatpush2.msra.mxu0 0.0
      %272 = vmatprep.subr.mxu0 0.0
      %273 = vmatpush2.msra.mxu0 0.0
      %274 = vmatprep.subr.mxu0 0.0
      %275 = vmatpush2.msra.mxu0 0.0
      %276 = vmatprep.subr.mxu0 0.0
      %277 = vmatpush2.msra.mxu0 0.0
      %278 = vmatprep.subr.mxu0 0.0
      %279 = vmatpush2.msra.mxu0 0.0
      %280 = vmatprep.subr.mxu0 0.0
      %281 = vmatpush2.msra.mxu0 0.0
      %282 = vmatprep.subr.mxu0 0.0
      %283 = vmatpush2.msra.mxu0 0.0
      %284 = vmatprep.subr.mxu0 0.0
      %285 = vmatpush2.msra.mxu0 0.0
      %286 = vmatprep.subr.mxu0 0.0
      %287 = vmatpush2.msra.mxu0 0.0
      %288 = vmatprep.subr.mxu0 0.0
      %289 = vmatpush2.msra.mxu0 0.0
      %290 = vmatprep.subr.mxu0 0.0
      %291 = vmatpush2.msra.mxu0 0.0
      %292 = vmatprep.subr.mxu0 0.0
      %293 = vmatpush2.msra.mxu0 0.0
      %294 = vmatprep.mubr.f32.mxu0 0.0
      %295 = vmatmul.mubr.f32.gmra.mxu0 %v223
      %v296 = vpop.f32.mrf.mxu0
      %v297 = vadd.f32 %v217, %v296
      %v298 = vpop.f32.mrf.mxu0
      %v299 = vadd.f32 %v217, %v298
      %300 = vdwg.mxu0
      %v301 = vlog2.pop %v297
      %v302 = vmul.f32 %v301, 0.6931472
      %v303 = vlog2.pop %v299
      %v304 = vmul.f32 %v303, 0.6931472
      %v305 = vmul.f32 %v302, -1e-06
      %v306 = vmul.f32 %v304, -1e-06
      %v307 = vmul.f32 %v305, 1.442695
      %v308 = vpow.pop %v307
      %v309 = vmul.f32 %v306, 1.442695
      %v310 = vpow.pop %v309
      %v313 = vcombine.low %v308, %v310
      %v315 = vmul.f32 %v211, %v313
      %316 = vst [vmem:[%s208] sm:$0xff] %v315
      %s317 = smul.u32 2, %s19
      %p318 = scmp.lt.s32.totalorder %s18, 1
      %s319 = scalar_select %p318, %s18, 1
      %p320 = scmp.lt.s32.totalorder %s317, 1
      %s321 = scalar_select %p320, %s317, 1
      %s322 = smul.addr %s319, 2
      %s323 = sadd.s32 %s321, %s322
      %s324 = smul.addr %s323, 4
      %s325 = scalar_lea.vmem %s3, %s324
      // Predicated region
      $region33: #{gdn_forward.1} parent=31 // pred_check
        %p326 = pneg %p116
      $region34: #{gdn_forward.1} parent=31 // pred_check_branch
        %328 = sbr.rel (%p326) target = $region36
      $region35: #{gdn_forward.1} parent=31 // pred_region
        %s329 = smul.u32 2, %s19
      $region36: #{gdn_forward.1} parent=31 // pred_fallthru
        _
    $region32: #{gdn_forward.1} parent=5 // pred_fallthru
      _
    %p330 = scmp.le.s32.totalorder 2, %s9
    // Predicated region
    $region37: #{gdn_forward.1} parent=5 // pred_check
      %p331 = pneg %p330
    $region38: #{gdn_forward.1} parent=5 // pred_check_branch
      %333 = sbr.rel (%p331) target = $region40
    $region39: #{gdn_forward.1} parent=5 // pred_region
      %s334 = ssub.s32 %s9, 2
      // Predicated region
      $region41: #{gdn_forward.1} parent=39 // pred_check
        %p335 = pneg %p122
      $region42: #{gdn_forward.1} parent=39 // pred_check_branch
        %337 = sbr.rel (%p335) target = $region44
      $region43: #{gdn_forward.1} parent=39 // pred_region
        %s338 = smul.u32 2, %s21
        %p339 = scmp.lt.s32.totalorder %s20, 1
        %s340 = scalar_select %p339, %s20, 1
        %p341 = scmp.lt.s32.totalorder %s338, 1
        %s342 = scalar_select %p341, %s338, 1
        %s343 = smul.addr %s340, 2
        %s344 = sadd.s32 %s342, %s343
        %s345 = smul.addr %s344, 4
        %s346 = scalar_lea.vmem %s3, %s345
      $region44: #{gdn_forward.1} parent=39 // pred_fallthru
        _
    $region40: #{gdn_forward.1} parent=5 // pred_fallthru
      _
  $region6: #{gdn_forward.1} parent=0 // loop_footer
    %s13 = sadd.s32 1, %s9
  $region7: #{gdn_forward.1} parent=0 // loop_footer_branch
    %8 = sbr.rel target = $region3
  $region8: #{gdn_forward.1} parent=0 // loop_exit
    _

</llo_original>
